<compile_context>
chip_gen: v7x
topology: tpu7x:2x2x1
jax: 0.10.0
libtpu: 0.0.40
codegen_flags: <defaults>
</compile_context>

<pallas_src>
import jax
import jax.numpy as jnp
from jax.experimental import pallas as pl
from jax.experimental.pallas import tpu as pltpu


def _autoencoder_kernel(x_ref,
                        w1_ref, b1_ref,
                        w2_ref, b2_ref,
                        w3_ref, b3_ref,
                        w4_ref, b4_ref,
                        o_ref):
    # Hoist bias reads once (f32, broadcast against the f32 accumulators).
    b1 = b1_ref[...]
    b2 = b2_ref[...]
    b3 = b3_ref[...]
    b4 = b4_ref[...]

    # bf16 operands, f32 accumulation on the MXU.
    x = x_ref[...].astype(jnp.bfloat16)                                  # (TB, F)

    h = jnp.dot(x, w1_ref[...], preferred_element_type=jnp.float32) + b1
    h = jnp.maximum(h, 0.0).astype(jnp.bfloat16)                         # encoder hidden

    h = jnp.dot(h, w2_ref[...], preferred_element_type=jnp.float32) + b2
    h = jnp.maximum(h, 0.0).astype(jnp.bfloat16)                         # code

    h = jnp.dot(h, w3_ref[...], preferred_element_type=jnp.float32) + b3
    h = jnp.maximum(h, 0.0).astype(jnp.bfloat16)                         # decoder hidden

    h = jnp.dot(h, w4_ref[...], preferred_element_type=jnp.float32) + b4
    o_ref[...] = jnp.maximum(h, 0.0)                                     # reconstructed (f32)


def _pick_batch_tile(B):
    """Prefer large tiles (>=256 rows fills a v6e/v7x MXU pass) while keeping
    at least 2 grid steps so v7x's second TensorCore gets work."""
    for t in (512, 256, 128, 64, 32, 16, 8):
        if B >= 2 * t:
            return t
    return 8


def _vmem_limit_bytes(batch_tile, F, H):
    # Double-buffered fp32 x + o tiles.
    io = 2 * 2 * batch_tile * F * 4
    # Weights (bf16) + biases (f32), x2 for the pipeline's buffering.
    wb = 2 * ((F * H + 2 * H * H + H * F) * 2 + (3 * H + F) * 4)
    # Headroom for compiler scratch; clamp to v7x's 64 MiB VMEM per TC.
    return min(max(io + wb + (4 << 20), 16 << 20), 64 << 20)


def autoencoder_forward(x, params, *, batch_tile=None):
    """x: (B, input_shape) fp32.  params: dict of (in,out)-transposed weights/biases."""
    B, F = x.shape
    H = params["w1"].shape[1]

    tile = batch_tile or _pick_batch_tile(B)
    tile = max(8, tile)

    # Pad batch up to a multiple of the tile (padded rows are sliced off below).
    B_pad = -(-B // tile) * tile
    if B_pad != B:
        x = jnp.pad(x, ((0, B_pad - B), (0, 0)))

    grid = (B_pad // tile,)

    # Weights in bf16 (native MXU operand dtype); biases stay f32 for the
    # f32-accumulated bias add.
    w1 = params["w1"].astype(jnp.bfloat16)
    w2 = params["w2"].astype(jnp.bfloat16)
    w3 = params["w3"].astype(jnp.bfloat16)
    w4 = params["w4"].astype(jnp.bfloat16)
    b1 = params["b1"].astype(jnp.float32)
    b2 = params["b2"].astype(jnp.float32)
    b3 = params["b3"].astype(jnp.float32)
    b4 = params["b4"].astype(jnp.float32)

    # Weights / biases: constant block index -> DMA'd once, VMEM-resident.
    def full(shape):
        return pl.BlockSpec(shape, lambda i: (0, 0))

    in_specs = [
        pl.BlockSpec((tile, F), lambda i: (i, 0)),   # x (batch-tiled)
        full((F, H)), full((1, H)),                  # w1, b1
        full((H, H)), full((1, H)),                  # w2, b2
        full((H, H)), full((1, H)),                  # w3, b3
        full((H, F)), full((1, F)),                  # w4, b4
    ]
    out_spec = pl.BlockSpec((tile, F), lambda i: (i, 0))
    # NOTE: if profiling still shows exposed DMA on the x/o streams, add
    # pipeline_mode=pl.Buffered(3) to the x in_spec / out_spec.

    out = pl.pallas_call(
        _autoencoder_kernel,
        out_shape=jax.ShapeDtypeStruct((B_pad, F), jnp.float32),
        grid_spec=pltpu.PrefetchScalarGridSpec(
            num_scalar_prefetch=0,
            grid=grid,
            in_specs=in_specs,
            out_specs=out_spec,
        ),
        compiler_params=pltpu.CompilerParams(
            dimension_semantics=("parallel",),
            vmem_limit_bytes=_vmem_limit_bytes(tile, F, H),
        ),
    )(x, w1, b1, w2, b2, w3, b3, w4, b4)

    return out[:B] if B_pad != B else out


def init_params(key, input_shape, hidden_nodes=32):
    """Deterministic init mirroring nn.Linear default (U(-1/sqrt(in), 1/sqrt(in))).
    Weights are stored transposed: (in_features, out_features)."""
    def linear(k, fan_in, fan_out):
        kw, kb = jax.random.split(k)
        bound = 1.0 / jnp.sqrt(fan_in)
        w = jax.random.uniform(kw, (fan_in, fan_out), jnp.float32, -bound, bound)
        b = jax.random.uniform(kb, (1, fan_out), jnp.float32, -bound, bound)
        return w, b

    k1, k2, k3, k4 = jax.random.split(key, 4)
    w1, b1 = linear(k1, input_shape, hidden_nodes)   # encoder_hidden_layer
    w2, b2 = linear(k2, hidden_nodes, hidden_nodes)  # encoder_output_layer
    w3, b3 = linear(k3, hidden_nodes, hidden_nodes)  # decoder_hidden_layer
    w4, b4 = linear(k4, hidden_nodes, input_shape)   # decoder_output_layer
    return {"w1": w1, "b1": b1, "w2": w2, "b2": b2,
            "w3": w3, "b3": b3, "w4": w4, "b4": b4}


def reference_forward(x, p, *, bf16_operands=True):
    """Pure-JAX reference.  bf16_operands=True mirrors the kernel's MXU dtype."""
    cast = (lambda a: a.astype(jnp.bfloat16)) if bf16_operands else (lambda a: a)
    relu = lambda z: jnp.maximum(z, 0.0)
    h = relu(jnp.dot(cast(x), cast(p["w1"]), preferred_element_type=jnp.float32) + p["b1"])
    h = relu(jnp.dot(cast(h), cast(p["w2"]), preferred_element_type=jnp.float32) + p["b2"])
    h = relu(jnp.dot(cast(h), cast(p["w3"]), preferred_element_type=jnp.float32) + p["b3"])
    return relu(jnp.dot(cast(h), cast(p["w4"]), preferred_element_type=jnp.float32) + p["b4"])


if __name__ == "__main__":
    key = jax.random.PRNGKey(0)
    k_params, k_x = jax.random.split(key)

    input_shape = 256      # kwargs['input_shape']
    hidden_nodes = 32
    batch = 256            # -> tile=128, grid=(2,): both v7x TCs get work

    params = init_params(k_params, input_shape, hidden_nodes)
    x = jax.random.normal(k_x, (batch, input_shape), jnp.float32)

    out = autoencoder_forward(x, params)
    out = jax.block_until_ready(out)

    ref = reference_forward(x, params, bf16_operands=True)
    assert out.shape == (batch, input_shape)
    assert jnp.allclose(out, ref, atol=1e-3, rtol=1e-3)

    print("KERNEL_OK")
</pallas_src>

<mosaic_0001>
module attributes {stable_mosaic.version = 11 : i64} {
  func.func @_autoencoder_kernel(%arg0: i32, %arg1: memref<128x256xf32, #tpu.memory_space<vmem>>, %arg2: memref<256x32xbf16, #tpu.memory_space<vmem>>, %arg3: memref<1x32xf32, #tpu.memory_space<vmem>>, %arg4: memref<32x32xbf16, #tpu.memory_space<vmem>>, %arg5: memref<1x32xf32, #tpu.memory_space<vmem>>, %arg6: memref<32x32xbf16, #tpu.memory_space<vmem>>, %arg7: memref<1x32xf32, #tpu.memory_space<vmem>>, %arg8: memref<32x256xbf16, #tpu.memory_space<vmem>>, %arg9: memref<1x256xf32, #tpu.memory_space<vmem>>, %arg10: memref<128x256xf32, #tpu.memory_space<vmem>>) attributes {dimension_semantics = [#tpu.dimension_semantics<parallel>], iteration_bounds = array<i64: 2>, scalar_prefetch = 0 : i64, scratch_operands = 0 : i64, tpu.core_type = #tpu.core_type<tc>, window_params = [{transform_indices = @transform_0, window_bounds = array<i64: 128, 256>}, {pipeline_mode = #tpu.pipeline_mode<synchronous>, transform_indices = @transform_1, window_bounds = array<i64: 256, 32>}, {pipeline_mode = #tpu.pipeline_mode<synchronous>, transform_indices = @transform_2, window_bounds = array<i64: 1, 32>}, {pipeline_mode = #tpu.pipeline_mode<synchronous>, transform_indices = @transform_3, window_bounds = array<i64: 32, 32>}, {pipeline_mode = #tpu.pipeline_mode<synchronous>, transform_indices = @transform_4, window_bounds = array<i64: 1, 32>}, {pipeline_mode = #tpu.pipeline_mode<synchronous>, transform_indices = @transform_5, window_bounds = array<i64: 32, 32>}, {pipeline_mode = #tpu.pipeline_mode<synchronous>, transform_indices = @transform_6, window_bounds = array<i64: 1, 32>}, {pipeline_mode = #tpu.pipeline_mode<synchronous>, transform_indices = @transform_7, window_bounds = array<i64: 32, 256>}, {pipeline_mode = #tpu.pipeline_mode<synchronous>, transform_indices = @transform_8, window_bounds = array<i64: 1, 256>}, {transform_indices = @transform_9, window_bounds = array<i64: 128, 256>}]} {
    %c0 = arith.constant 0 : index
    %c0_0 = arith.constant 0 : index
    %0 = vector.load %arg3[%c0, %c0_0] : memref<1x32xf32, #tpu.memory_space<vmem>>, vector<1x32xf32>
    %c0_1 = arith.constant 0 : index
    %c0_2 = arith.constant 0 : index
    %1 = vector.load %arg5[%c0_1, %c0_2] : memref<1x32xf32, #tpu.memory_space<vmem>>, vector<1x32xf32>
    %c0_3 = arith.constant 0 : index
    %c0_4 = arith.constant 0 : index
    %2 = vector.load %arg7[%c0_3, %c0_4] : memref<1x32xf32, #tpu.memory_space<vmem>>, vector<1x32xf32>
    %c0_5 = arith.constant 0 : index
    %c0_6 = arith.constant 0 : index
    %3 = vector.load %arg9[%c0_5, %c0_6] : memref<1x256xf32, #tpu.memory_space<vmem>>, vector<1x256xf32>
    %c0_7 = arith.constant 0 : index
    %c0_8 = arith.constant 0 : index
    %4 = vector.load %arg1[%c0_7, %c0_8] : memref<128x256xf32, #tpu.memory_space<vmem>>, vector<128x256xf32>
    %5 = arith.truncf %4 : vector<128x256xf32> to vector<128x256xbf16>
    %c0_9 = arith.constant 0 : index
    %c0_10 = arith.constant 0 : index
    %6 = vector.load %arg2[%c0_9, %c0_10] : memref<256x32xbf16, #tpu.memory_space<vmem>>, vector<256x32xbf16>
    %cst = arith.constant dense<0.000000e+00> : vector<128x32xf32>
    %7 = tpu.matmul %5, %6, %cst {dimension_numbers = #tpu.dot_dimension_numbers<[1], [0], [0], [1], [0, 0, 1, 1], [], []>} : vector<128x256xbf16>, vector<256x32xbf16>, vector<128x32xf32> -> vector<128x32xf32>
    %8 = vector.broadcast %0 : vector<1x32xf32> to vector<128x32xf32>
    %9 = arith.addf %7, %8 : vector<128x32xf32>
    %cst_11 = arith.constant 0.000000e+00 : f32
    %10 = vector.broadcast %cst_11 : f32 to vector<128x32xf32>
    %11 = arith.maximumf %9, %10 : vector<128x32xf32>
    %12 = arith.truncf %11 : vector<128x32xf32> to vector<128x32xbf16>
    %c0_12 = arith.constant 0 : index
    %c0_13 = arith.constant 0 : index
    %13 = vector.load %arg4[%c0_12, %c0_13] : memref<32x32xbf16, #tpu.memory_space<vmem>>, vector<32x32xbf16>
    %cst_14 = arith.constant dense<0.000000e+00> : vector<128x32xf32>
    %14 = tpu.matmul %12, %13, %cst_14 {dimension_numbers = #tpu.dot_dimension_numbers<[1], [0], [0], [1], [0, 0, 1, 1], [], []>} : vector<128x32xbf16>, vector<32x32xbf16>, vector<128x32xf32> -> vector<128x32xf32>
    %15 = vector.broadcast %1 : vector<1x32xf32> to vector<128x32xf32>
    %16 = arith.addf %14, %15 : vector<128x32xf32>
    %cst_15 = arith.constant 0.000000e+00 : f32
    %17 = vector.broadcast %cst_15 : f32 to vector<128x32xf32>
    %18 = arith.maximumf %16, %17 : vector<128x32xf32>
    %19 = arith.truncf %18 : vector<128x32xf32> to vector<128x32xbf16>
    %c0_16 = arith.constant 0 : index
    %c0_17 = arith.constant 0 : index
    %20 = vector.load %arg6[%c0_16, %c0_17] : memref<32x32xbf16, #tpu.memory_space<vmem>>, vector<32x32xbf16>
    %cst_18 = arith.constant dense<0.000000e+00> : vector<128x32xf32>
    %21 = tpu.matmul %19, %20, %cst_18 {dimension_numbers = #tpu.dot_dimension_numbers<[1], [0], [0], [1], [0, 0, 1, 1], [], []>} : vector<128x32xbf16>, vector<32x32xbf16>, vector<128x32xf32> -> vector<128x32xf32>
    %22 = vector.broadcast %2 : vector<1x32xf32> to vector<128x32xf32>
    %23 = arith.addf %21, %22 : vector<128x32xf32>
    %cst_19 = arith.constant 0.000000e+00 : f32
    %24 = vector.broadcast %cst_19 : f32 to vector<128x32xf32>
    %25 = arith.maximumf %23, %24 : vector<128x32xf32>
    %26 = arith.truncf %25 : vector<128x32xf32> to vector<128x32xbf16>
    %c0_20 = arith.constant 0 : index
    %c0_21 = arith.constant 0 : index
    %27 = vector.load %arg8[%c0_20, %c0_21] : memref<32x256xbf16, #tpu.memory_space<vmem>>, vector<32x256xbf16>
    %cst_22 = arith.constant dense<0.000000e+00> : vector<128x256xf32>
    %28 = tpu.matmul %26, %27, %cst_22 {dimension_numbers = #tpu.dot_dimension_numbers<[1], [0], [0], [1], [0, 0, 1, 1], [], []>} : vector<128x32xbf16>, vector<32x256xbf16>, vector<128x256xf32> -> vector<128x256xf32>
    %29 = vector.broadcast %3 : vector<1x256xf32> to vector<128x256xf32>
    %30 = arith.addf %28, %29 : vector<128x256xf32>
    %cst_23 = arith.constant 0.000000e+00 : f32
    %31 = vector.broadcast %cst_23 : f32 to vector<128x256xf32>
    %32 = arith.maximumf %30, %31 : vector<128x256xf32>
    %c0_24 = arith.constant 0 : index
    %c0_25 = arith.constant 0 : index
    %33 = vector.load %arg10[%c0_24, %c0_25] : memref<128x256xf32, #tpu.memory_space<vmem>>, vector<128x256xf32>
    tpu.vector_store %arg10[%c0_24, %c0_25], %32 {strides = array<i32>} : memref<128x256xf32, #tpu.memory_space<vmem>>, vector<128x256xf32>,
    return
  }
  func.func @transform_0(%arg0: i32) -> (i32, i32) {
    %c0_i32 = arith.constant 0 : i32
    %c0_i32_0 = arith.constant 0 : i32
    return %arg0, %c0_i32 : i32, i32
  }
  func.func @transform_1(%arg0: i32) -> (i32, i32) {
    %c0_i32 = arith.constant 0 : i32
    %c0_i32_0 = arith.constant 0 : i32
    %c0_i32_1 = arith.constant 0 : i32
    return %c0_i32, %c0_i32_0 : i32, i32
  }
  func.func @transform_2(%arg0: i32) -> (i32, i32) {
    %c0_i32 = arith.constant 0 : i32
    %c0_i32_0 = arith.constant 0 : i32
    %c0_i32_1 = arith.constant 0 : i32
    return %c0_i32, %c0_i32_0 : i32, i32
  }
  func.func @transform_3(%arg0: i32) -> (i32, i32) {
    %c0_i32 = arith.constant 0 : i32
    %c0_i32_0 = arith.constant 0 : i32
    %c0_i32_1 = arith.constant 0 : i32
    return %c0_i32, %c0_i32_0 : i32, i32
  }
  func.func @transform_4(%arg0: i32) -> (i32, i32) {
    %c0_i32 = arith.constant 0 : i32
    %c0_i32_0 = arith.constant 0 : i32
    %c0_i32_1 = arith.constant 0 : i32
    return %c0_i32, %c0_i32_0 : i32, i32
  }
  func.func @transform_5(%arg0: i32) -> (i32, i32) {
    %c0_i32 = arith.constant 0 : i32
    %c0_i32_0 = arith.constant 0 : i32
    %c0_i32_1 = arith.constant 0 : i32
    return %c0_i32, %c0_i32_0 : i32, i32
  }
  func.func @transform_6(%arg0: i32) -> (i32, i32) {
    %c0_i32 = arith.constant 0 : i32
    %c0_i32_0 = arith.constant 0 : i32
    %c0_i32_1 = arith.constant 0 : i32
    return %c0_i32, %c0_i32_0 : i32, i32
  }
  func.func @transform_7(%arg0: i32) -> (i32, i32) {
    %c0_i32 = arith.constant 0 : i32
    %c0_i32_0 = arith.constant 0 : i32
    %c0_i32_1 = arith.constant 0 : i32
    return %c0_i32, %c0_i32_0 : i32, i32
  }
  func.func @transform_8(%arg0: i32) -> (i32, i32) {
    %c0_i32 = arith.constant 0 : i32
    %c0_i32_0 = arith.constant 0 : i32
    %c0_i32_1 = arith.constant 0 : i32
    return %c0_i32, %c0_i32_0 : i32, i32
  }
  func.func @transform_9(%arg0: i32) -> (i32, i32) {
    %c0_i32 = arith.constant 0 : i32
    %c0_i32_0 = arith.constant 0 : i32
    return %arg0, %c0_i32 : i32, i32
  }
}

</mosaic_0001>

<llo_original>
// kernel: tpu_custom_call.1
$region0: #{tpu_custom_call.1}
  #allocation0 [shape = 'u32[]', space=smem, size = 0x4, offset = 0x4, fixed_abs, tag = 'smem constant byte address 0x4 - core index']
  #allocation1 [shape = 'u32[144,128]{1,0:T(1,128)}', space=vmem, size = 0x12000, scoped, tag = 'internal scratch']
  %s0 = inlined_call_operand.hbm [shape: f32[256,256], index: 0, kind: input, shape index: {}]
  %s1 = inlined_call_operand.vmem [shape: bf16[256,32], index: 1, kind: input, shape index: {}]
  %s2 = inlined_call_operand.vmem [shape: f32[1,32], index: 2, kind: input, shape index: {}]
  %s3 = inlined_call_operand.vmem [shape: bf16[32,32], index: 3, kind: input, shape index: {}]
  %s4 = inlined_call_operand.vmem [shape: f32[1,32], index: 4, kind: input, shape index: {}]
  %s5 = inlined_call_operand.vmem [shape: bf16[32,32], index: 5, kind: input, shape index: {}]
  %s6 = inlined_call_operand.vmem [shape: f32[1,32], index: 6, kind: input, shape index: {}]
  %s7 = inlined_call_operand.vmem [shape: bf16[32,256], index: 7, kind: input, shape index: {}]
  %s8 = inlined_call_operand.vmem [shape: f32[1,256], index: 8, kind: input, shape index: {}]
  %s9 = inlined_call_operand.hbm [shape: f32[256,256], index: 9, kind: output, shape index: {}]
  %s10 = sld [smem:[#allocation0]]
  $region73: #{tpu_custom_call.1} parent=0
    _
  %s12 = ssub.s32 1, %s10
  %s13 = scalar_select 0, %s12, %s10
  $region1: #{tpu_custom_call.1} parent=0
    #allocation2 [shape = 'u8[262144]{0}', space=vmem, size = 0x40000, scoped, tag = 'input window, operand 0']
    #allocation3 [shape = 's32[2]{0}', space=sflag, size = 0x8, scoped, tag = 'scoped memory for tpu_custom_call.1']
    #allocation4 [shape = 's32[2]{0}', space=sflag, size = 0x8, scoped, tag = 'scoped memory for tpu_custom_call.1']
    #allocation5 [shape = 'u8[262144]{0}', space=vmem, size = 0x40000, scoped, tag = 'output window, operand 0']
    %14 = vsyncpa [#allocation3], 0
    %s15 = scalar_lea.sflag [#allocation3], 1
    %16 = vsyncpa %s15, 0
    %17 = vsyncpa [#allocation4], 0
    %s18 = scalar_lea.sflag [#allocation4], 1
    %19 = vsyncpa %s18, 0
    loop: start=0, step=1, limit=4
    $region2: #{tpu_custom_call.1} parent=1 // loop_pre_header
      _
    $region3: #{tpu_custom_call.1} parent=1 // loop_header
      %s21 = sphi 0, %s25
      %p22 = scmp.ge.s32.totalorder %s21, 4
      %s31 = sphi 0, %s33
      %s34 = sphi 0, %s31
      %s35 = sphi 0, %s34
      %s51 = sphi 0, %s35
      %s55 = sphi 0, %s55
      %s57 = sphi 0, %s55
      %s58 = sphi 0, %s57
      %s72 = sphi 0, %s58
      %s76 = sphi 0, %s76
      %s78 = sphi 0, %s76
      %s79 = sphi 0, %s78
      %s93 = sphi 0, %s79
      %s97 = sphi 0, %s97
      %s99 = sphi 0, %s97
      %s100 = sphi 0, %s99
      %s114 = sphi 0, %s100
      %s118 = sphi 0, %s118
      %s120 = sphi 0, %s118
      %s121 = sphi 0, %s120
      %s135 = sphi 0, %s121
      %s139 = sphi 0, %s139
      %s141 = sphi 0, %s139
      %s142 = sphi 0, %s141
      %s156 = sphi 0, %s142
      %s160 = sphi 0, %s160
      %s162 = sphi 0, %s160
      %s163 = sphi 0, %s162
      %s177 = sphi 0, %s163
      %s181 = sphi 0, %s181
      %s183 = sphi 0, %s181
      %s184 = sphi 0, %s183
      %s198 = sphi 0, %s184
      %s202 = sphi 0, %s202
      %s204 = sphi 0, %s202
      %s205 = sphi 0, %s204
      %s219 = sphi 0, %s205
      %s225 = sphi 0, %s227
      %s228 = sphi 0, %s225
      %s229 = sphi 0, %s228
      %s245 = sphi 0, %s229
    $region4: #{tpu_custom_call.1} parent=1 // loop_header_branch
      %24 = sbr.rel (%p22) target = $region8
    $region5: #{tpu_custom_call.1} parent=1 // loop_body
      %s26 = ssub.s32 %s21, 1
      %s27 = ssub.s32 %s21, 2
      %s28 = sadd.s32 %s21, 1
      %s29 = ssub.s32 %s21, %s28
      %p30 = scmp.eq.s32.totalorder %s29, 0
      %s32 = sadd.s32 %s31, 1
      %s33 = scalar_select %p30, %s31, %s32
      %p36 = pneg %p30
      %p37 = scmp.eq.s32.totalorder %s21, 1
      %p38 = por %p36, %p37
      %p39 = scmp.ne.s32.totalorder %s31, %s34
      %p40 = scmp.eq.s32.totalorder %s21, 0
      %p41 = por %p39, %p40
      %p42 = scmp.ne.s32.totalorder %s31, %s34
      %p43 = scmp.eq.s32.totalorder %s26, 1
      %p44 = por %p42, %p43
      %p45 = scmp.ne.s32.totalorder %s34, %s35
      %p46 = scmp.eq.s32.totalorder %s26, 0
      %p47 = por %p45, %p46
      %p48 = scmp.ne.s32.totalorder %s34, %s35
      %p49 = scmp.eq.s32.totalorder %s27, 1
      %p50 = por %p48, %p49
      %p52 = scmp.ne.s32.totalorder %s35, %s51
      %p53 = scmp.eq.s32.totalorder %s27, 0
      %p54 = por %p52, %p53
      %s56 = sadd.s32 %s55, 1
      %p59 = scmp.eq.s32.totalorder %s21, 1
      %p60 = scmp.ne.s32.totalorder %s55, %s57
      %p61 = scmp.eq.s32.totalorder %s21, 0
      %p62 = por %p60, %p61
      %p63 = scmp.ne.s32.totalorder %s55, %s57
      %p64 = scmp.eq.s32.totalorder %s26, 1
      %p65 = por %p63, %p64
      %p66 = scmp.ne.s32.totalorder %s57, %s58
      %p67 = scmp.eq.s32.totalorder %s26, 0
      %p68 = por %p66, %p67
      %p69 = scmp.ne.s32.totalorder %s57, %s58
      %p70 = scmp.eq.s32.totalorder %s27, 1
      %p71 = por %p69, %p70
      %p73 = scmp.ne.s32.totalorder %s58, %s72
      %p74 = scmp.eq.s32.totalorder %s27, 0
      %p75 = por %p73, %p74
      %s77 = sadd.s32 %s76, 1
      %p80 = scmp.eq.s32.totalorder %s21, 1
      %p81 = scmp.ne.s32.totalorder %s76, %s78
      %p82 = scmp.eq.s32.totalorder %s21, 0
      %p83 = por %p81, %p82
      %p84 = scmp.ne.s32.totalorder %s76, %s78
      %p85 = scmp.eq.s32.totalorder %s26, 1
      %p86 = por %p84, %p85
      %p87 = scmp.ne.s32.totalorder %s78, %s79
      %p88 = scmp.eq.s32.totalorder %s26, 0
      %p89 = por %p87, %p88
      %p90 = scmp.ne.s32.totalorder %s78, %s79
      %p91 = scmp.eq.s32.totalorder %s27, 1
      %p92 = por %p90, %p91
      %p94 = scmp.ne.s32.totalorder %s79, %s93
      %p95 = scmp.eq.s32.totalorder %s27, 0
      %p96 = por %p94, %p95
      %s98 = sadd.s32 %s97, 1
      %p101 = scmp.eq.s32.totalorder %s21, 1
      %p102 = scmp.ne.s32.totalorder %s97, %s99
      %p103 = scmp.eq.s32.totalorder %s21, 0
      %p104 = por %p102, %p103
      %p105 = scmp.ne.s32.totalorder %s97, %s99
      %p106 = scmp.eq.s32.totalorder %s26, 1
      %p107 = por %p105, %p106
      %p108 = scmp.ne.s32.totalorder %s99, %s100
      %p109 = scmp.eq.s32.totalorder %s26, 0
      %p110 = por %p108, %p109
      %p111 = scmp.ne.s32.totalorder %s99, %s100
      %p112 = scmp.eq.s32.totalorder %s27, 1
      %p113 = por %p111, %p112
      %p115 = scmp.ne.s32.totalorder %s100, %s114
      %p116 = scmp.eq.s32.totalorder %s27, 0
      %p117 = por %p115, %p116
      %s119 = sadd.s32 %s118, 1
      %p122 = scmp.eq.s32.totalorder %s21, 1
      %p123 = scmp.ne.s32.totalorder %s118, %s120
      %p124 = scmp.eq.s32.totalorder %s21, 0
      %p125 = por %p123, %p124
      %p126 = scmp.ne.s32.totalorder %s118, %s120
      %p127 = scmp.eq.s32.totalorder %s26, 1
      %p128 = por %p126, %p127
      %p129 = scmp.ne.s32.totalorder %s120, %s121
      %p130 = scmp.eq.s32.totalorder %s26, 0
      %p131 = por %p129, %p130
      %p132 = scmp.ne.s32.totalorder %s120, %s121
      %p133 = scmp.eq.s32.totalorder %s27, 1
      %p134 = por %p132, %p133
      %p136 = scmp.ne.s32.totalorder %s121, %s135
      %p137 = scmp.eq.s32.totalorder %s27, 0
      %p138 = por %p136, %p137
      %s140 = sadd.s32 %s139, 1
      %p143 = scmp.eq.s32.totalorder %s21, 1
      %p144 = scmp.ne.s32.totalorder %s139, %s141
      %p145 = scmp.eq.s32.totalorder %s21, 0
      %p146 = por %p144, %p145
      %p147 = scmp.ne.s32.totalorder %s139, %s141
      %p148 = scmp.eq.s32.totalorder %s26, 1
      %p149 = por %p147, %p148
      %p150 = scmp.ne.s32.totalorder %s141, %s142
      %p151 = scmp.eq.s32.totalorder %s26, 0
      %p152 = por %p150, %p151
      %p153 = scmp.ne.s32.totalorder %s141, %s142
      %p154 = scmp.eq.s32.totalorder %s27, 1
      %p155 = por %p153, %p154
      %p157 = scmp.ne.s32.totalorder %s142, %s156
      %p158 = scmp.eq.s32.totalorder %s27, 0
      %p159 = por %p157, %p158
      %s161 = sadd.s32 %s160, 1
      %p164 = scmp.eq.s32.totalorder %s21, 1
      %p165 = scmp.ne.s32.totalorder %s160, %s162
      %p166 = scmp.eq.s32.totalorder %s21, 0
      %p167 = por %p165, %p166
      %p168 = scmp.ne.s32.totalorder %s160, %s162
      %p169 = scmp.eq.s32.totalorder %s26, 1
      %p170 = por %p168, %p169
      %p171 = scmp.ne.s32.totalorder %s162, %s163
      %p172 = scmp.eq.s32.totalorder %s26, 0
      %p173 = por %p171, %p172
      %p174 = scmp.ne.s32.totalorder %s162, %s163
      %p175 = scmp.eq.s32.totalorder %s27, 1
      %p176 = por %p174, %p175
      %p178 = scmp.ne.s32.totalorder %s163, %s177
      %p179 = scmp.eq.s32.totalorder %s27, 0
      %p180 = por %p178, %p179
      %s182 = sadd.s32 %s181, 1
      %p185 = scmp.eq.s32.totalorder %s21, 1
      %p186 = scmp.ne.s32.totalorder %s181, %s183
      %p187 = scmp.eq.s32.totalorder %s21, 0
      %p188 = por %p186, %p187
      %p189 = scmp.ne.s32.totalorder %s181, %s183
      %p190 = scmp.eq.s32.totalorder %s26, 1
      %p191 = por %p189, %p190
      %p192 = scmp.ne.s32.totalorder %s183, %s184
      %p193 = scmp.eq.s32.totalorder %s26, 0
      %p194 = por %p192, %p193
      %p195 = scmp.ne.s32.totalorder %s183, %s184
      %p196 = scmp.eq.s32.totalorder %s27, 1
      %p197 = por %p195, %p196
      %p199 = scmp.ne.s32.totalorder %s184, %s198
      %p200 = scmp.eq.s32.totalorder %s27, 0
      %p201 = por %p199, %p200
      %s203 = sadd.s32 %s202, 1
      %p206 = scmp.eq.s32.totalorder %s21, 1
      %p207 = scmp.ne.s32.totalorder %s202, %s204
      %p208 = scmp.eq.s32.totalorder %s21, 0
      %p209 = por %p207, %p208
      %p210 = scmp.ne.s32.totalorder %s202, %s204
      %p211 = scmp.eq.s32.totalorder %s26, 1
      %p212 = por %p210, %p211
      %p213 = scmp.ne.s32.totalorder %s204, %s205
      %p214 = scmp.eq.s32.totalorder %s26, 0
      %p215 = por %p213, %p214
      %p216 = scmp.ne.s32.totalorder %s204, %s205
      %p217 = scmp.eq.s32.totalorder %s27, 1
      %p218 = por %p216, %p217
      %p220 = scmp.ne.s32.totalorder %s205, %s219
      %p221 = scmp.eq.s32.totalorder %s27, 0
      %p222 = por %p220, %p221
      %s223 = ssub.s32 %s21, %s28
      %p224 = scmp.eq.s32.totalorder %s223, 0
      %s226 = sadd.s32 %s225, 1
      %s227 = scalar_select %p224, %s225, %s226
      %p230 = pneg %p224
      %p231 = scmp.eq.s32.totalorder %s21, 1
      %p232 = por %p230, %p231
      %p233 = scmp.ne.s32.totalorder %s225, %s228
      %p234 = scmp.eq.s32.totalorder %s21, 0
      %p235 = por %p233, %p234
      %p236 = scmp.ne.s32.totalorder %s225, %s228
      %p237 = scmp.eq.s32.totalorder %s26, 1
      %p238 = por %p236, %p237
      %p239 = scmp.ne.s32.totalorder %s228, %s229
      %p240 = scmp.eq.s32.totalorder %s26, 0
      %p241 = por %p239, %p240
      %p242 = scmp.ne.s32.totalorder %s228, %s229
      %p243 = scmp.eq.s32.totalorder %s27, 1
      %p244 = por %p242, %p243
      %p246 = scmp.ne.s32.totalorder %s229, %s245
      %p247 = scmp.eq.s32.totalorder %s27, 0
      %p248 = por %p246, %p247
      %p249 = scmp.le.s32.totalorder 1, %s21
      %p250 = scmp.lt.s32.totalorder %s21, 3
      %p251 = pnand %p249, %p250
      %p252 = pneg %p251
      // Predicated region
      $region9: #{tpu_custom_call.1} parent=5 // pred_check
        _
      $region10: #{tpu_custom_call.1} parent=5 // pred_check_branch
        %254 = sbr.rel (%p251) target = $region12
      $region11: #{tpu_custom_call.1} parent=5 // pred_region
        %s255 = ssub.s32 %s21, 1
        // Predicated region
        $region13: #{tpu_custom_call.1} parent=11 // pred_check
          %p256 = pneg %p68
        $region14: #{tpu_custom_call.1} parent=11 // pred_check_branch
          %258 = sbr.rel (%p256) target = $region16
        $region15: #{tpu_custom_call.1} parent=11 // pred_region
          _
        $region16: #{tpu_custom_call.1} parent=11 // pred_fallthru
          _
        // Predicated region
        $region17: #{tpu_custom_call.1} parent=11 // pred_check
          %p259 = pneg %p89
        $region18: #{tpu_custom_call.1} parent=11 // pred_check_branch
          %261 = sbr.rel (%p259) target = $region20
        $region19: #{tpu_custom_call.1} parent=11 // pred_region
          _
        $region20: #{tpu_custom_call.1} parent=11 // pred_fallthru
          _
        // Predicated region
        $region21: #{tpu_custom_call.1} parent=11 // pred_check
          %p262 = pneg %p110
        $region22: #{tpu_custom_call.1} parent=11 // pred_check_branch
          %264 = sbr.rel (%p262) target = $region24
        $region23: #{tpu_custom_call.1} parent=11 // pred_region
          _
        $region24: #{tpu_custom_call.1} parent=11 // pred_fallthru
          _
        // Predicated region
        $region25: #{tpu_custom_call.1} parent=11 // pred_check
          %p265 = pneg %p131
        $region26: #{tpu_custom_call.1} parent=11 // pred_check_branch
          %267 = sbr.rel (%p265) target = $region28
        $region27: #{tpu_custom_call.1} parent=11 // pred_region
          _
        $region28: #{tpu_custom_call.1} parent=11 // pred_fallthru
          _
        // Predicated region
        $region29: #{tpu_custom_call.1} parent=11 // pred_check
          %p268 = pneg %p152
        $region30: #{tpu_custom_call.1} parent=11 // pred_check_branch
          %270 = sbr.rel (%p268) target = $region32
        $region31: #{tpu_custom_call.1} parent=11 // pred_region
          _
        $region32: #{tpu_custom_call.1} parent=11 // pred_fallthru
          _
        // Predicated region
        $region33: #{tpu_custom_call.1} parent=11 // pred_check
          %p271 = pneg %p173
        $region34: #{tpu_custom_call.1} parent=11 // pred_check_branch
          %273 = sbr.rel (%p271) target = $region36
        $region35: #{tpu_custom_call.1} parent=11 // pred_region
          _
        $region36: #{tpu_custom_call.1} parent=11 // pred_fallthru
          _
        // Predicated region
        $region37: #{tpu_custom_call.1} parent=11 // pred_check
          %p274 = pneg %p194
        $region38: #{tpu_custom_call.1} parent=11 // pred_check_branch
          %276 = sbr.rel (%p274) target = $region40
        $region39: #{tpu_custom_call.1} parent=11 // pred_region
          _
        $region40: #{tpu_custom_call.1} parent=11 // pred_fallthru
          _
        // Predicated region
        $region41: #{tpu_custom_call.1} parent=11 // pred_check
          %p277 = pneg %p215
        $region42: #{tpu_custom_call.1} parent=11 // pred_check_branch
          %279 = sbr.rel (%p277) target = $region44
        $region43: #{tpu_custom_call.1} parent=11 // pred_region
          _
        $region44: #{tpu_custom_call.1} parent=11 // pred_fallthru
          _
      $region12: #{tpu_custom_call.1} parent=5 // pred_fallthru
        _
      %p280 = scmp.lt.s32.totalorder %s21, 2
      // Predicated region
      $region45: #{tpu_custom_call.1} parent=5 // pred_check
        %p281 = pneg %p280
      $region46: #{tpu_custom_call.1} parent=5 // pred_check_branch
        %283 = sbr.rel (%p281) target = $region48
      $region47: #{tpu_custom_call.1} parent=5 // pred_region
        // Predicated region
        $region49: #{tpu_custom_call.1} parent=47 // pred_check
          %p284 = pneg %p41
        $region50: #{tpu_custom_call.1} parent=47 // pred_check_branch
          %286 = sbr.rel (%p284) target = $region52
        $region51: #{tpu_custom_call.1} parent=47 // pred_region
          %s287 = sand.u32 %s31, 1
          %s288 = scalar_lea.sflag [#allocation3], %s287
          %s289 = sand.u32 %s31, 1
          %s290 = smul.addr %s289, 256
          %s291 = scalar_lea.vmem [#allocation2], %s290
          %s292 = smul.u32 16, %s21
          %s294 = ssub.s32 4096, 4096
          %295 = vsyncadd %s288, %s294
          %s296 = smul.addr %s292, 2
          %s297 = smul.addr %s296, 128
          %s298 = scalar_lea.hbm %s0, %s297
          %s299 = sshll.u32 %s291, 4
          %s300 = int_to_ptr.vmem [resolvable:$true] %s299
          %305 = dma.hbm_to_vmem [thread:$0]  %s298, 4096, %s300, %s288, 256, 256, 16
        $region52: #{tpu_custom_call.1} parent=47 // pred_fallthru
          _
      $region48: #{tpu_custom_call.1} parent=5 // pred_fallthru
        _
      %p306 = scmp.le.s32.totalorder 1, %s21
      %p307 = scmp.lt.s32.totalorder %s21, 3
      %p308 = pnand %p306, %p307
      %p309 = pneg %p308
      // Predicated region
      $region53: #{tpu_custom_call.1} parent=5 // pred_check
        _
      $region54: #{tpu_custom_call.1} parent=5 // pred_check_branch
        %311 = sbr.rel (%p308) target = $region56
      $region55: #{tpu_custom_call.1} parent=5 // pred_region
        %s312 = ssub.s32 %s21, 1
        %s313 = sand.u32 %s34, 1
        %s314 = scalar_lea.sflag [#allocation3], %s313
        %s315 = sand.u32 %s34, 1
        %s316 = smul.addr %s315, 256
        %s317 = scalar_lea.vmem [#allocation2], %s316
        // Predicated region
        $region57: #{tpu_custom_call.1} parent=55 // pred_check
          %p318 = pneg %p47
        $region58: #{tpu_custom_call.1} parent=55 // pred_check_branch
          %320 = sbr.rel (%p318) target = $region60
        $region59: #{tpu_custom_call.1} parent=55 // pred_region
          %321 = dma.done %s314, 4096
        $region60: #{tpu_custom_call.1} parent=55 // pred_fallthru
          _
        %s322 = sand.u32 %s34, 1
        %s323 = scalar_lea.sflag [#allocation3], %s322
        %s324 = sand.u32 %s34, 1
        %s325 = smul.addr %s324, 256
        %s326 = scalar_lea.vmem [#allocation2], %s325
        %p327 = pneg %p47
        %p328 = pneg %p44
        %p329 = pneg %p68
        %p330 = pneg %p65
        %p331 = pneg %p89
        %p332 = pneg %p86
        %p333 = pneg %p110
        %p334 = pneg %p107
        %p335 = pneg %p131
        %p336 = pneg %p128
        %p337 = pneg %p152
        %p338 = pneg %p149
        %p339 = pneg %p173
        %p340 = pneg %p170
        %p341 = pneg %p194
        %p342 = pneg %p191
        %p343 = pneg %p215
        %p344 = pneg %p212
        %p345 = pneg %p241
        %p346 = pneg %p238
        %s347 = sand.u32 %s228, 1
        %s348 = scalar_lea.sflag [#allocation4], %s347
        %s349 = sand.u32 %s228, 1
        %s350 = smul.addr %s349, 256
        %s351 = scalar_lea.vmem [#allocation5], %s350
        %s352 = smul.u32 16, %s26
        %s353 = smul.u32 16, %s26
        %v355 = vld [vmem:[%s2] sm:$0x1]
        %v356 = vld [vmem:[%s4] sm:$0x1]
        %v357 = vld [vmem:[%s6] sm:$0x1]
        %v358 = vld [vmem:[%s8] sm:$0x3]
        %v359 = vld [vmem:[%s317] sm:$0xff]
        %v360 = vld [vmem:[%s317 + $0x8] sm:$0xff]
        %v361 = vld [vmem:[%s317 + $0x10] sm:$0xff]
        %v362 = vld [vmem:[%s317 + $0x18] sm:$0xff]
        %v363 = vld [vmem:[%s317 + $0x20] sm:$0xff]
        %v364 = vld [vmem:[%s317 + $0x28] sm:$0xff]
        %v365 = vld [vmem:[%s317 + $0x30] sm:$0xff]
        %v366 = vld [vmem:[%s317 + $0x38] sm:$0xff]
        %v367 = vld [vmem:[%s317 + $0x40] sm:$0xff]
        %v368 = vld [vmem:[%s317 + $0x48] sm:$0xff]
        %v369 = vld [vmem:[%s317 + $0x50] sm:$0xff]
        %v370 = vld [vmem:[%s317 + $0x58] sm:$0xff]
        %v371 = vld [vmem:[%s317 + $0x60] sm:$0xff]
        %v372 = vld [vmem:[%s317 + $0x68] sm:$0xff]
        %v373 = vld [vmem:[%s317 + $0x70] sm:$0xff]
        %v374 = vld [vmem:[%s317 + $0x78] sm:$0xff]
        %v375 = vld [vmem:[%s317 + $0x80] sm:$0xff]
        %v376 = vld [vmem:[%s317 + $0x88] sm:$0xff]
        %v377 = vld [vmem:[%s317 + $0x90] sm:$0xff]
        %v378 = vld [vmem:[%s317 + $0x98] sm:$0xff]
        %v379 = vld [vmem:[%s317 + $0xa0] sm:$0xff]
        %v380 = vld [vmem:[%s317 + $0xa8] sm:$0xff]
        %v381 = vld [vmem:[%s317 + $0xb0] sm:$0xff]
        %v382 = vld [vmem:[%s317 + $0xb8] sm:$0xff]
        %v383 = vld [vmem:[%s317 + $0xc0] sm:$0xff]
        %v384 = vld [vmem:[%s317 + $0xc8] sm:$0xff]
        %v385 = vld [vmem:[%s317 + $0xd0] sm:$0xff]
        %v386 = vld [vmem:[%s317 + $0xd8] sm:$0xff]
        %v387 = vld [vmem:[%s317 + $0xe0] sm:$0xff]
        %v388 = vld [vmem:[%s317 + $0xe8] sm:$0xff]
        %v389 = vld [vmem:[%s317 + $0xf0] sm:$0xff]
        %v390 = vld [vmem:[%s317 + $0xf8] sm:$0xff]
        %v391 = vpack.c.bf16 %v361, %v359
        %v392 = vpack.c.bf16 %v362, %v360
        %v393 = vpack.c.bf16 %v365, %v363
        %v394 = vpack.c.bf16 %v366, %v364
        %v395 = vpack.c.bf16 %v369, %v367
        %v396 = vpack.c.bf16 %v370, %v368
        %v397 = vpack.c.bf16 %v373, %v371
        %v398 = vpack.c.bf16 %v374, %v372
        %v399 = vpack.c.bf16 %v377, %v375
        %v400 = vpack.c.bf16 %v378, %v376
        %v401 = vpack.c.bf16 %v381, %v379
        %v402 = vpack.c.bf16 %v382, %v380
        %v403 = vpack.c.bf16 %v385, %v383
        %v404 = vpack.c.bf16 %v386, %v384
        %v405 = vpack.c.bf16 %v389, %v387
        %v406 = vpack.c.bf16 %v390, %v388
        %v407 = vld [vmem:[%s1] sm:$0xf]
        %v408 = vld [vmem:[%s1 + $0x4] sm:$0xf]
        %v409 = vld [vmem:[%s1 + $0x8] sm:$0xf]
        %v410 = vld [vmem:[%s1 + $0xc] sm:$0xf]
        %v411 = vld [vmem:[%s1 + $0x10] sm:$0xf]
        %v412 = vld [vmem:[%s1 + $0x14] sm:$0xf]
        %v413 = vld [vmem:[%s1 + $0x18] sm:$0xf]
        %v414 = vld [vmem:[%s1 + $0x1c] sm:$0xf]
        %v415 = vld [vmem:[%s1 + $0x20] sm:$0xf]
        %v416 = vld [vmem:[%s1 + $0x24] sm:$0xf]
        %v417 = vld [vmem:[%s1 + $0x28] sm:$0xf]
        %v418 = vld [vmem:[%s1 + $0x2c] sm:$0xf]
        %v419 = vld [vmem:[%s1 + $0x30] sm:$0xf]
        %v420 = vld [vmem:[%s1 + $0x34] sm:$0xf]
        %v421 = vld [vmem:[%s1 + $0x38] sm:$0xf]
        %v422 = vld [vmem:[%s1 + $0x3c] sm:$0xf]
        %v423 = vld [vmem:[%s1 + $0x40] sm:$0xf]
        %v424 = vld [vmem:[%s1 + $0x44] sm:$0xf]
        %v425 = vld [vmem:[%s1 + $0x48] sm:$0xf]
        %v426 = vld [vmem:[%s1 + $0x4c] sm:$0xf]
        %v427 = vld [vmem:[%s1 + $0x50] sm:$0xf]
        %v428 = vld [vmem:[%s1 + $0x54] sm:$0xf]
        %v429 = vld [vmem:[%s1 + $0x58] sm:$0xf]
        %v430 = vld [vmem:[%s1 + $0x5c] sm:$0xf]
        %v431 = vld [vmem:[%s1 + $0x60] sm:$0xf]
        %v432 = vld [vmem:[%s1 + $0x64] sm:$0xf]
        %v433 = vld [vmem:[%s1 + $0x68] sm:$0xf]
        %v434 = vld [vmem:[%s1 + $0x6c] sm:$0xf]
        %v435 = vld [vmem:[%s1 + $0x70] sm:$0xf]
        %v436 = vld [vmem:[%s1 + $0x74] sm:$0xf]
        %v437 = vld [vmem:[%s1 + $0x78] sm:$0xf]
        %v438 = vld [vmem:[%s1 + $0x7c] sm:$0xf]
        %v440 = vlaneseq
        %v441 = vshrl.u32 %v440, 7
        %v442 = vsub.s32 0, %v441
        %v443 = vrot.slane %v355, %v442
        %v477 = vunpack.c.l.b16 %v407
        %v478 = vunpack.c.l.b16 %v408
        %v479 = vunpack.c.l.b16 %v409
        %v480 = vunpack.c.l.b16 %v410
        %v481 = vunpack.c.l.b16 %v411
        %v482 = vunpack.c.l.b16 %v412
        %v483 = vunpack.c.l.b16 %v413
        %v484 = vunpack.c.l.b16 %v414
        %v485 = vunpack.c.l.b16 %v415
        %v486 = vunpack.c.l.b16 %v416
        %v487 = vunpack.c.l.b16 %v417
        %v488 = vunpack.c.l.b16 %v418
        %v489 = vunpack.c.l.b16 %v419
        %v490 = vunpack.c.l.b16 %v420
        %v491 = vunpack.c.l.b16 %v421
        %v492 = vunpack.c.l.b16 %v422
        %v493 = vunpack.c.l.b16 %v423
        %v494 = vunpack.c.l.b16 %v424
        %v495 = vunpack.c.l.b16 %v425
        %v496 = vunpack.c.l.b16 %v426
        %v497 = vunpack.c.l.b16 %v427
        %v498 = vunpack.c.l.b16 %v428
        %v499 = vunpack.c.l.b16 %v429
        %v500 = vunpack.c.l.b16 %v430
        %v501 = vunpack.c.l.b16 %v431
        %v502 = vunpack.c.l.b16 %v432
        %v503 = vunpack.c.l.b16 %v433
        %v504 = vunpack.c.l.b16 %v434
        %v505 = vunpack.c.l.b16 %v435
        %v506 = vunpack.c.l.b16 %v436
        %v507 = vunpack.c.l.b16 %v437
        %v508 = vunpack.c.l.b16 %v438
        %v509 = vpack.c.b16 %v478, %v477
        %v510 = vpack.c.b16 %v480, %v479
        %v511 = vpack.c.b16 %v482, %v481
        %v512 = vpack.c.b16 %v484, %v483
        %v513 = vpack.c.b16 %v486, %v485
        %v514 = vpack.c.b16 %v488, %v487
        %v515 = vpack.c.b16 %v490, %v489
        %v516 = vpack.c.b16 %v492, %v491
        %v517 = vpack.c.b16 %v494, %v493
        %v518 = vpack.c.b16 %v496, %v495
        %v519 = vpack.c.b16 %v498, %v497
        %v520 = vpack.c.b16 %v500, %v499
        %v521 = vpack.c.b16 %v502, %v501
        %v522 = vpack.c.b16 %v504, %v503
        %v523 = vpack.c.b16 %v506, %v505
        %v524 = vpack.c.b16 %v508, %v507
        %541 = vmatprep.subr.bf16.mxu0 0
        %542 = vmatpush1.bf16.msra.mxu0 %v509
        %543 = vmatprep.subr.bf16.mxu0 0
        %544 = vmatpush1.bf16.msra.mxu0 %v510
        %545 = vmatprep.subr.bf16.mxu0 0
        %546 = vmatpush1.bf16.msra.mxu0 %v511
        %547 = vmatprep.subr.bf16.mxu0 0
        %548 = vmatpush1.bf16.msra.mxu0 %v512
        %549 = vmatprep.subr.bf16.mxu0 0
        %550 = vmatpush1.bf16.msra.mxu0 %v513
        %551 = vmatprep.subr.bf16.mxu0 0
        %552 = vmatpush1.bf16.msra.mxu0 %v514
        %553 = vmatprep.subr.bf16.mxu0 0
        %554 = vmatpush1.bf16.msra.mxu0 %v515
        %555 = vmatprep.subr.bf16.mxu0 0
        %556 = vmatpush1.bf16.msra.mxu0 %v516
        %557 = vmatprep.subr.bf16.mxu0 0
        %558 = vmatpush1.bf16.msra.mxu0 %v517
        %559 = vmatprep.subr.bf16.mxu0 0
        %560 = vmatpush1.bf16.msra.mxu0 %v518
        %561 = vmatprep.subr.bf16.mxu0 0
        %562 = vmatpush1.bf16.msra.mxu0 %v519
        %563 = vmatprep.subr.bf16.mxu0 0
        %564 = vmatpush1.bf16.msra.mxu0 %v520
        %565 = vmatprep.subr.bf16.mxu0 0
        %566 = vmatpush1.bf16.msra.mxu0 %v521
        %567 = vmatprep.subr.bf16.mxu0 0
        %568 = vmatpush1.bf16.msra.mxu0 %v522
        %569 = vmatprep.subr.bf16.mxu0 0
        %570 = vmatpush1.bf16.msra.mxu0 %v523
        %571 = vmatprep.subr.bf16.mxu0 0
        %572 = vmatpush1.bf16.msra.mxu0 %v524
        %573 = vmatprep.mubr.bf16.mxu0 %v392
        %574 = vmatmul.mubr.bf16.gmra.mrb[0].mxu0 %v391
        %v575 = vpop.f32.mrb[0].mxu0
        %v576 = vadd.f32 %v443, %v575
        %v577 = vpop.f32.mrb[0].mxu0
        %v578 = vpop.f32.mrb[0].mxu0
        %v579 = vadd.f32 %v443, %v578
        %v580 = vpop.f32.mrb[0].mxu0
        %581 = vmatprep.mubr.bf16.mxu0 %v394
        %582 = vmatmul.mubr.bf16.gmra.mrb[0].mxu0 %v393
        %v583 = vpop.f32.mrb[0].mxu0
        %v584 = vadd.f32 %v443, %v583
        %v585 = vpop.f32.mrb[0].mxu0
        %v586 = vpop.f32.mrb[0].mxu0
        %v587 = vadd.f32 %v443, %v586
        %v588 = vpop.f32.mrb[0].mxu0
        %589 = vmatprep.mubr.bf16.mxu0 %v396
        %590 = vmatmul.mubr.bf16.gmra.mrb[0].mxu0 %v395
        %v591 = vpop.f32.mrb[0].mxu0
        %v592 = vadd.f32 %v443, %v591
        %v593 = vpop.f32.mrb[0].mxu0
        %v594 = vpop.f32.mrb[0].mxu0
        %v595 = vadd.f32 %v443, %v594
        %v596 = vpop.f32.mrb[0].mxu0
        %597 = vmatprep.mubr.bf16.mxu0 %v398
        %598 = vmatmul.mubr.bf16.gmra.mrb[0].mxu0 %v397
        %v599 = vpop.f32.mrb[0].mxu0
        %v600 = vadd.f32 %v443, %v599
        %v601 = vpop.f32.mrb[0].mxu0
        %v602 = vpop.f32.mrb[0].mxu0
        %v603 = vadd.f32 %v443, %v602
        %v604 = vpop.f32.mrb[0].mxu0
        %605 = vmatprep.mubr.bf16.mxu0 %v400
        %606 = vmatmul.mubr.bf16.gmra.mrb[0].mxu0 %v399
        %v607 = vpop.f32.mrb[0].mxu0
        %v608 = vadd.f32 %v443, %v607
        %v609 = vpop.f32.mrb[0].mxu0
        %v610 = vpop.f32.mrb[0].mxu0
        %v611 = vadd.f32 %v443, %v610
        %v612 = vpop.f32.mrb[0].mxu0
        %613 = vmatprep.mubr.bf16.mxu0 %v402
        %614 = vmatmul.mubr.bf16.gmra.mrb[0].mxu0 %v401
        %v615 = vpop.f32.mrb[0].mxu0
        %v616 = vadd.f32 %v443, %v615
        %v617 = vpop.f32.mrb[0].mxu0
        %v618 = vpop.f32.mrb[0].mxu0
        %v619 = vadd.f32 %v443, %v618
        %v620 = vpop.f32.mrb[0].mxu0
        %621 = vmatprep.mubr.bf16.mxu0 %v404
        %622 = vmatmul.mubr.bf16.gmra.mrb[0].mxu0 %v403
        %v623 = vpop.f32.mrb[0].mxu0
        %v624 = vadd.f32 %v443, %v623
        %v625 = vpop.f32.mrb[0].mxu0
        %v626 = vpop.f32.mrb[0].mxu0
        %v627 = vadd.f32 %v443, %v626
        %v628 = vpop.f32.mrb[0].mxu0
        %629 = vmatprep.mubr.bf16.mxu0 %v406
        %630 = vmatmul.mubr.bf16.gmra.mrb[0].mxu0 %v405
        %v631 = vpop.f32.mrb[0].mxu0
        %v632 = vadd.f32 %v443, %v631
        %v633 = vpop.f32.mrb[0].mxu0
        %v634 = vpop.f32.mrb[0].mxu0
        %v635 = vadd.f32 %v443, %v634
        %v636 = vpop.f32.mrb[0].mxu0
        %637 = vdwg.mxu0
        %v638 = vmax.f32 %v576, 0.0
        %v639 = vmax.f32 %v579, 0.0
        %v640 = vmax.f32 %v584, 0.0
        %v641 = vmax.f32 %v587, 0.0
        %v642 = vmax.f32 %v592, 0.0
        %v643 = vmax.f32 %v595, 0.0
        %v644 = vmax.f32 %v600, 0.0
        %v645 = vmax.f32 %v603, 0.0
        %v646 = vmax.f32 %v608, 0.0
        %v647 = vmax.f32 %v611, 0.0
        %v648 = vmax.f32 %v616, 0.0
        %v649 = vmax.f32 %v619, 0.0
        %v650 = vmax.f32 %v624, 0.0
        %v651 = vmax.f32 %v627, 0.0
        %v652 = vmax.f32 %v632, 0.0
        %v653 = vmax.f32 %v635, 0.0
        %v654 = vpack.c.bf16 %v639, %v638
        %v655 = vpack.c.bf16 %v641, %v640
        %v656 = vpack.c.bf16 %v643, %v642
        %v657 = vpack.c.bf16 %v645, %v644
        %v658 = vpack.c.bf16 %v647, %v646
        %v659 = vpack.c.bf16 %v649, %v648
        %v660 = vpack.c.bf16 %v651, %v650
        %v661 = vpack.c.bf16 %v653, %v652
        %v662 = vld [vmem:[%s3] sm:$0xf]
        %v663 = vld [vmem:[%s3 + $0x4] sm:$0xf]
        %v664 = vld [vmem:[%s3 + $0x8] sm:$0xf]
        %v665 = vld [vmem:[%s3 + $0xc] sm:$0xf]
        %v667 = vlaneseq
        %v668 = vshrl.u32 %v667, 7
        %v669 = vsub.s32 0, %v668
        %v670 = vrot.slane %v356, %v669
        %v676 = vunpack.c.l.b16 %v662
        %v677 = vunpack.c.l.b16 %v663
        %v678 = vunpack.c.l.b16 %v664
        %v679 = vunpack.c.l.b16 %v665
        %v680 = vpack.c.b16 %v677, %v676
        %v681 = vpack.c.b16 %v679, %v678
        %vm684 = vcmask 261120
        %v686 = vsel %vm684, %v654, 0
        %v689 = vsel %vm684, %v655, 0
        %v692 = vsel %vm684, %v656, 0
        %v695 = vsel %vm684, %v657, 0
        %v698 = vsel %vm684, %v658, 0
        %v701 = vsel %vm684, %v659, 0
        %v704 = vsel %vm684, %v660, 0
        %v707 = vsel %vm684, %v661, 0
        %709 = vmatprep.subr.bf16.mxu0 0
        %710 = vmatpush1.bf16.msra.mxu0 %v680
        %711 = vmatprep.subr.bf16.mxu0 0
        %712 = vmatpush1.bf16.msra.mxu0 %v681
        %713 = vmatprep.subr.bf16.mxu0 0
        %714 = vmatpush1.bf16.msra.mxu0 0
        %715 = vmatprep.subr.bf16.mxu0 0
        %716 = vmatpush1.bf16.msra.mxu0 0
        %717 = vmatprep.subr.bf16.mxu0 0
        %718 = vmatpush1.bf16.msra.mxu0 0
        %719 = vmatprep.subr.bf16.mxu0 0
        %720 = vmatpush1.bf16.msra.mxu0 0
        %721 = vmatprep.subr.bf16.mxu0 0
        %722 = vmatpush1.bf16.msra.mxu0 0
        %723 = vmatprep.subr.bf16.mxu0 0
        %724 = vmatpush1.bf16.msra.mxu0 0
        %725 = vmatprep.subr.bf16.mxu0 0
        %726 = vmatpush1.bf16.msra.mxu0 0
        %727 = vmatprep.subr.bf16.mxu0 0
        %728 = vmatpush1.bf16.msra.mxu0 0
        %729 = vmatprep.subr.bf16.mxu0 0
        %730 = vmatpush1.bf16.msra.mxu0 0
        %731 = vmatprep.subr.bf16.mxu0 0
        %732 = vmatpush1.bf16.msra.mxu0 0
        %733 = vmatprep.subr.bf16.mxu0 0
        %734 = vmatpush1.bf16.msra.mxu0 0
        %735 = vmatprep.subr.bf16.mxu0 0
        %736 = vmatpush1.bf16.msra.mxu0 0
        %737 = vmatprep.subr.bf16.mxu0 0
        %738 = vmatpush1.bf16.msra.mxu0 0
        %739 = vmatprep.subr.bf16.mxu0 0
        %740 = vmatpush1.bf16.msra.mxu0 0
        %741 = vmatprep.mubr.bf16.mxu0 0
        %742 = vmatmul.mubr.bf16.gmra.mrb[0].mxu0 %v686
        %v743 = vpop.f32.mrb[0].mxu0
        %v744 = vadd.f32 %v670, %v743
        %v745 = vpop.f32.mrb[0].mxu0
        %v746 = vpop.f32.mrb[0].mxu0
        %v747 = vadd.f32 %v670, %v746
        %v748 = vpop.f32.mrb[0].mxu0
        %749 = vmatprep.mubr.bf16.mxu0 0
        %750 = vmatmul.mubr.bf16.gmra.mrb[0].mxu0 %v689
        %v751 = vpop.f32.mrb[0].mxu0
        %v752 = vadd.f32 %v670, %v751
        %v753 = vpop.f32.mrb[0].mxu0
        %v754 = vpop.f32.mrb[0].mxu0
        %v755 = vadd.f32 %v670, %v754
        %v756 = vpop.f32.mrb[0].mxu0
        %757 = vmatprep.mubr.bf16.mxu0 0
        %758 = vmatmul.mubr.bf16.gmra.mrb[0].mxu0 %v692
        %v759 = vpop.f32.mrb[0].mxu0
        %v760 = vadd.f32 %v670, %v759
        %v761 = vpop.f32.mrb[0].mxu0
        %v762 = vpop.f32.mrb[0].mxu0
        %v763 = vadd.f32 %v670, %v762
        %v764 = vpop.f32.mrb[0].mxu0
        %765 = vmatprep.mubr.bf16.mxu0 0
        %766 = vmatmul.mubr.bf16.gmra.mrb[0].mxu0 %v695
        %v767 = vpop.f32.mrb[0].mxu0
        %v768 = vadd.f32 %v670, %v767
        %v769 = vpop.f32.mrb[0].mxu0
        %v770 = vpop.f32.mrb[0].mxu0
        %v771 = vadd.f32 %v670, %v770
        %v772 = vpop.f32.mrb[0].mxu0
        %773 = vmatprep.mubr.bf16.mxu0 0
        %774 = vmatmul.mubr.bf16.gmra.mrb[0].mxu0 %v698
        %v775 = vpop.f32.mrb[0].mxu0
        %v776 = vadd.f32 %v670, %v775
        %v777 = vpop.f32.mrb[0].mxu0
        %v778 = vpop.f32.mrb[0].mxu0
        %v779 = vadd.f32 %v670, %v778
        %v780 = vpop.f32.mrb[0].mxu0
        %781 = vmatprep.mubr.bf16.mxu0 0
        %782 = vmatmul.mubr.bf16.gmra.mrb[0].mxu0 %v701
        %v783 = vpop.f32.mrb[0].mxu0
        %v784 = vadd.f32 %v670, %v783
        %v785 = vpop.f32.mrb[0].mxu0
        %v786 = vpop.f32.mrb[0].mxu0
        %v787 = vadd.f32 %v670, %v786
        %v788 = vpop.f32.mrb[0].mxu0
        %789 = vmatprep.mubr.bf16.mxu0 0
        %790 = vmatmul.mubr.bf16.gmra.mrb[0].mxu0 %v704
        %v791 = vpop.f32.mrb[0].mxu0
        %v792 = vadd.f32 %v670, %v791
        %v793 = vpop.f32.mrb[0].mxu0
        %v794 = vpop.f32.mrb[0].mxu0
        %v795 = vadd.f32 %v670, %v794
        %v796 = vpop.f32.mrb[0].mxu0
        %797 = vmatprep.mubr.bf16.mxu0 0
        %798 = vmatmul.mubr.bf16.gmra.mrb[0].mxu0 %v707
        %v799 = vpop.f32.mrb[0].mxu0
        %v800 = vadd.f32 %v670, %v799
        %v801 = vpop.f32.mrb[0].mxu0
        %v802 = vpop.f32.mrb[0].mxu0
        %v803 = vadd.f32 %v670, %v802
        %v804 = vpop.f32.mrb[0].mxu0
        %805 = vdwg.mxu0
        %v806 = vmax.f32 %v744, 0.0
        %v807 = vmax.f32 %v747, 0.0
        %v808 = vmax.f32 %v752, 0.0
        %v809 = vmax.f32 %v755, 0.0
        %v810 = vmax.f32 %v760, 0.0
        %v811 = vmax.f32 %v763, 0.0
        %v812 = vmax.f32 %v768, 0.0
        %v813 = vmax.f32 %v771, 0.0
        %v814 = vmax.f32 %v776, 0.0
        %v815 = vmax.f32 %v779, 0.0
        %v816 = vmax.f32 %v784, 0.0
        %v817 = vmax.f32 %v787, 0.0
        %v818 = vmax.f32 %v792, 0.0
        %v819 = vmax.f32 %v795, 0.0
        %v820 = vmax.f32 %v800, 0.0
        %v821 = vmax.f32 %v803, 0.0
        %v822 = vpack.c.bf16 %v807, %v806
        %v823 = vpack.c.bf16 %v809, %v808
        %v824 = vpack.c.bf16 %v811, %v810
        %v825 = vpack.c.bf16 %v813, %v812
        %v826 = vpack.c.bf16 %v815, %v814
        %v827 = vpack.c.bf16 %v817, %v816
        %v828 = vpack.c.bf16 %v819, %v818
        %v829 = vpack.c.bf16 %v821, %v820
        %v830 = vld [vmem:[%s5] sm:$0xf]
        %v831 = vld [vmem:[%s5 + $0x4] sm:$0xf]
        %v832 = vld [vmem:[%s5 + $0x8] sm:$0xf]
        %v833 = vld [vmem:[%s5 + $0xc] sm:$0xf]
        %v835 = vlaneseq
        %v836 = vshrl.u32 %v835, 7
        %v837 = vsub.s32 0, %v836
        %v838 = vrot.slane %v357, %v837
        %v844 = vunpack.c.l.b16 %v830
        %v845 = vunpack.c.l.b16 %v831
        %v846 = vunpack.c.l.b16 %v832
        %v847 = vunpack.c.l.b16 %v833
        %v848 = vpack.c.b16 %v845, %v844
        %v849 = vpack.c.b16 %v847, %v846
        %v853 = vsel %vm684, %v822, 0
        %v856 = vsel %vm684, %v823, 0
        %v859 = vsel %vm684, %v824, 0
        %v862 = vsel %vm684, %v825, 0
        %v865 = vsel %vm684, %v826, 0
        %v868 = vsel %vm684, %v827, 0
        %v871 = vsel %vm684, %v828, 0
        %v874 = vsel %vm684, %v829, 0
        %876 = vmatprep.subr.bf16.mxu0 0
        %877 = vmatpush1.bf16.msra.mxu0 %v848
        %878 = vmatprep.subr.bf16.mxu0 0
        %879 = vmatpush1.bf16.msra.mxu0 %v849
        %880 = vmatprep.subr.bf16.mxu0 0
        %881 = vmatpush1.bf16.msra.mxu0 0
        %882 = vmatprep.subr.bf16.mxu0 0
        %883 = vmatpush1.bf16.msra.mxu0 0
        %884 = vmatprep.subr.bf16.mxu0 0
        %885 = vmatpush1.bf16.msra.mxu0 0
        %886 = vmatprep.subr.bf16.mxu0 0
        %887 = vmatpush1.bf16.msra.mxu0 0
        %888 = vmatprep.subr.bf16.mxu0 0
        %889 = vmatpush1.bf16.msra.mxu0 0
        %890 = vmatprep.subr.bf16.mxu0 0
        %891 = vmatpush1.bf16.msra.mxu0 0
        %892 = vmatprep.subr.bf16.mxu0 0
        %893 = vmatpush1.bf16.msra.mxu0 0
        %894 = vmatprep.subr.bf16.mxu0 0
        %895 = vmatpush1.bf16.msra.mxu0 0
        %896 = vmatprep.subr.bf16.mxu0 0
        %897 = vmatpush1.bf16.msra.mxu0 0
        %898 = vmatprep.subr.bf16.mxu0 0
        %899 = vmatpush1.bf16.msra.mxu0 0
        %900 = vmatprep.subr.bf16.mxu0 0
        %901 = vmatpush1.bf16.msra.mxu0 0
        %902 = vmatprep.subr.bf16.mxu0 0
        %903 = vmatpush1.bf16.msra.mxu0 0
        %904 = vmatprep.subr.bf16.mxu0 0
        %905 = vmatpush1.bf16.msra.mxu0 0
        %906 = vmatprep.subr.bf16.mxu0 0
        %907 = vmatpush1.bf16.msra.mxu0 0
        %908 = vmatprep.mubr.bf16.mxu0 0
        %909 = vmatmul.mubr.bf16.gmra.mrb[0].mxu0 %v853
        %v910 = vpop.f32.mrb[0].mxu0
        %v911 = vadd.f32 %v838, %v910
        %v912 = vpop.f32.mrb[0].mxu0
        %v913 = vpop.f32.mrb[0].mxu0
        %v914 = vadd.f32 %v838, %v913
        %v915 = vpop.f32.mrb[0].mxu0
        %916 = vmatprep.mubr.bf16.mxu0 0
        %917 = vmatmul.mubr.bf16.gmra.mrb[0].mxu0 %v856
        %v918 = vpop.f32.mrb[0].mxu0
        %v919 = vadd.f32 %v838, %v918
        %v920 = vpop.f32.mrb[0].mxu0
        %v921 = vpop.f32.mrb[0].mxu0
        %v922 = vadd.f32 %v838, %v921
        %v923 = vpop.f32.mrb[0].mxu0
        %924 = vmatprep.mubr.bf16.mxu0 0
        %925 = vmatmul.mubr.bf16.gmra.mrb[0].mxu0 %v859
        %v926 = vpop.f32.mrb[0].mxu0
        %v927 = vadd.f32 %v838, %v926
        %v928 = vpop.f32.mrb[0].mxu0
        %v929 = vpop.f32.mrb[0].mxu0
        %v930 = vadd.f32 %v838, %v929
        %v931 = vpop.f32.mrb[0].mxu0
        %932 = vmatprep.mubr.bf16.mxu0 0
        %933 = vmatmul.mubr.bf16.gmra.mrb[0].mxu0 %v862
        %v934 = vpop.f32.mrb[0].mxu0
        %v935 = vadd.f32 %v838, %v934
        %v936 = vpop.f32.mrb[0].mxu0
        %v937 = vpop.f32.mrb[0].mxu0
        %v938 = vadd.f32 %v838, %v937
        %v939 = vpop.f32.mrb[0].mxu0
        %940 = vmatprep.mubr.bf16.mxu0 0
        %941 = vmatmul.mubr.bf16.gmra.mrb[0].mxu0 %v865
        %v942 = vpop.f32.mrb[0].mxu0
        %v943 = vadd.f32 %v838, %v942
        %v944 = vpop.f32.mrb[0].mxu0
        %v945 = vpop.f32.mrb[0].mxu0
        %v946 = vadd.f32 %v838, %v945
        %v947 = vpop.f32.mrb[0].mxu0
        %948 = vmatprep.mubr.bf16.mxu0 0
        %949 = vmatmul.mubr.bf16.gmra.mrb[0].mxu0 %v868
        %v950 = vpop.f32.mrb[0].mxu0
        %v951 = vadd.f32 %v838, %v950
        %v952 = vpop.f32.mrb[0].mxu0
        %v953 = vpop.f32.mrb[0].mxu0
        %v954 = vadd.f32 %v838, %v953
        %v955 = vpop.f32.mrb[0].mxu0
        %956 = vmatprep.mubr.bf16.mxu0 0
        %957 = vmatmul.mubr.bf16.gmra.mrb[0].mxu0 %v871
        %v958 = vpop.f32.mrb[0].mxu0
        %v959 = vadd.f32 %v838, %v958
        %v960 = vpop.f32.mrb[0].mxu0
        %v961 = vpop.f32.mrb[0].mxu0
        %v962 = vadd.f32 %v838, %v961
        %v963 = vpop.f32.mrb[0].mxu0
        %964 = vmatprep.mubr.bf16.mxu0 0
        %965 = vmatmul.mubr.bf16.gmra.mrb[0].mxu0 %v874
        %v966 = vpop.f32.mrb[0].mxu0
        %v967 = vadd.f32 %v838, %v966
        %v968 = vpop.f32.mrb[0].mxu0
        %v969 = vpop.f32.mrb[0].mxu0
        %v970 = vadd.f32 %v838, %v969
        %v971 = vpop.f32.mrb[0].mxu0
        %972 = vdwg.mxu0
        %v973 = vmax.f32 %v911, 0.0
        %v974 = vmax.f32 %v914, 0.0
        %v975 = vmax.f32 %v919, 0.0
        %v976 = vmax.f32 %v922, 0.0
        %v977 = vmax.f32 %v927, 0.0
        %v978 = vmax.f32 %v930, 0.0
        %v979 = vmax.f32 %v935, 0.0
        %v980 = vmax.f32 %v938, 0.0
        %v981 = vmax.f32 %v943, 0.0
        %v982 = vmax.f32 %v946, 0.0
        %v983 = vmax.f32 %v951, 0.0
        %v984 = vmax.f32 %v954, 0.0
        %v985 = vmax.f32 %v959, 0.0
        %v986 = vmax.f32 %v962, 0.0
        %v987 = vmax.f32 %v967, 0.0
        %v988 = vmax.f32 %v970, 0.0
        %v989 = vpack.c.bf16 %v974, %v973
        %v990 = vpack.c.bf16 %v976, %v975
        %v991 = vpack.c.bf16 %v978, %v977
        %v992 = vpack.c.bf16 %v980, %v979
        %v993 = vpack.c.bf16 %v982, %v981
        %v994 = vpack.c.bf16 %v984, %v983
        %v995 = vpack.c.bf16 %v986, %v985
        %v996 = vpack.c.bf16 %v988, %v987
        %v997 = vld [vmem:[%s7] sm:$0xff]
        %v998 = vld [vmem:[%s7 + $0x8] sm:$0xff]
        %v999 = vld [vmem:[%s7 + $0x10] sm:$0xff]
        %v1000 = vld [vmem:[%s7 + $0x18] sm:$0xff]
        %v1002 = vlaneseq
        %v1003 = vshrl.u32 %v1002, 7
        %v1004 = vsub.s32 0, %v1003
        %v1005 = vrot.slane %v358, %v1004
        %v1006 = vlaneseq
        %v1007 = vshrl.u32 %v1006, 7
        %v1008 = vsub.s32 1, %v1007
        %v1009 = vrot.slane %v358, %v1008
        %v1016 = vunpack.c.l.b16 %v997
        %v1017 = vunpack.c.h.b16 %v997
        %v1018 = vunpack.c.l.b16 %v998
        %v1019 = vunpack.c.h.b16 %v998
        %v1020 = vunpack.c.l.b16 %v999
        %v1021 = vunpack.c.h.b16 %v999
        %v1022 = vunpack.c.l.b16 %v1000
        %v1023 = vunpack.c.h.b16 %v1000
        %v1024 = vpack.c.b16 %v1018, %v1016
        %v1025 = vpack.c.b16 %v1019, %v1017
        %v1026 = vpack.c.b16 %v1022, %v1020
        %v1027 = vpack.c.b16 %v1023, %v1021
        %v1033 = vsel %vm684, %v989, 0
        %v1036 = vsel %vm684, %v990, 0
        %v1039 = vsel %vm684, %v991, 0
        %v1042 = vsel %vm684, %v992, 0
        %v1045 = vsel %vm684, %v993, 0
        %v1048 = vsel %vm684, %v994, 0
        %v1051 = vsel %vm684, %v995, 0
        %v1054 = vsel %vm684, %v996, 0
        %1056 = vmatprep.subr.bf16.mxu0 %v1025
        %1057 = vmatpush1.bf16.msra.mxu0 %v1024
        %1058 = vmatprep.subr.bf16.mxu0 %v1027
        %1059 = vmatpush1.bf16.msra.mxu0 %v1026
        %1060 = vmatprep.subr.bf16.mxu0 0
        %1061 = vmatpush1.bf16.msra.mxu0 0
        %1062 = vmatprep.subr.bf16.mxu0 0
        %1063 = vmatpush1.bf16.msra.mxu0 0
        %1064 = vmatprep.subr.bf16.mxu0 0
        %1065 = vmatpush1.bf16.msra.mxu0 0
        %1066 = vmatprep.subr.bf16.mxu0 0
        %1067 = vmatpush1.bf16.msra.mxu0 0
        %1068 = vmatprep.subr.bf16.mxu0 0
        %1069 = vmatpush1.bf16.msra.mxu0 0
        %1070 = vmatprep.subr.bf16.mxu0 0
        %1071 = vmatpush1.bf16.msra.mxu0 0
        %1072 = vmatprep.subr.bf16.mxu0 0
        %1073 = vmatpush1.bf16.msra.mxu0 0
        %1074 = vmatprep.subr.bf16.mxu0 0
        %1075 = vmatpush1.bf16.msra.mxu0 0
        %1076 = vmatprep.subr.bf16.mxu0 0
        %1077 = vmatpush1.bf16.msra.mxu0 0
        %1078 = vmatprep.subr.bf16.mxu0 0
        %1079 = vmatpush1.bf16.msra.mxu0 0
        %1080 = vmatprep.subr.bf16.mxu0 0
        %1081 = vmatpush1.bf16.msra.mxu0 0
        %1082 = vmatprep.subr.bf16.mxu0 0
        %1083 = vmatpush1.bf16.msra.mxu0 0
        %1084 = vmatprep.subr.bf16.mxu0 0
        %1085 = vmatpush1.bf16.msra.mxu0 0
        %1086 = vmatprep.subr.bf16.mxu0 0
        %1087 = vmatpush1.bf16.msra.mxu0 0
        %1088 = vmatprep.mubr.bf16.mxu0 0
        %1089 = vmatmul.mubr.bf16.gmra.mrb[0].mxu0 %v1033
        %v1090 = vpop.f32.mrb[0].mxu0
        %v1091 = vadd.f32 %v1005, %v1090
        %v1092 = vpop.f32.mrb[0].mxu0
        %v1093 = vadd.f32 %v1009, %v1092
        %v1094 = vpop.f32.mrb[0].mxu0
        %v1095 = vadd.f32 %v1005, %v1094
        %v1096 = vpop.f32.mrb[0].mxu0
        %v1097 = vadd.f32 %v1009, %v1096
        %1098 = vmatprep.mubr.bf16.mxu0 0
        %1099 = vmatmul.mubr.bf16.gmra.mrb[0].mxu0 %v1036
        %v1100 = vpop.f32.mrb[0].mxu0
        %v1101 = vadd.f32 %v1005, %v1100
        %v1102 = vpop.f32.mrb[0].mxu0
        %v1103 = vadd.f32 %v1009, %v1102
        %v1104 = vpop.f32.mrb[0].mxu0
        %v1105 = vadd.f32 %v1005, %v1104
        %v1106 = vpop.f32.mrb[0].mxu0
        %v1107 = vadd.f32 %v1009, %v1106
        %1108 = vmatprep.mubr.bf16.mxu0 0
        %1109 = vmatmul.mubr.bf16.gmra.mrb[0].mxu0 %v1039
        %v1110 = vpop.f32.mrb[0].mxu0
        %v1111 = vadd.f32 %v1005, %v1110
        %v1112 = vpop.f32.mrb[0].mxu0
        %v1113 = vadd.f32 %v1009, %v1112
        %v1114 = vpop.f32.mrb[0].mxu0
        %v1115 = vadd.f32 %v1005, %v1114
        %v1116 = vpop.f32.mrb[0].mxu0
        %v1117 = vadd.f32 %v1009, %v1116
        %1118 = vmatprep.mubr.bf16.mxu0 0
        %1119 = vmatmul.mubr.bf16.gmra.mrb[0].mxu0 %v1042
        %v1120 = vpop.f32.mrb[0].mxu0
        %v1121 = vadd.f32 %v1005, %v1120
        %v1122 = vpop.f32.mrb[0].mxu0
        %v1123 = vadd.f32 %v1009, %v1122
        %v1124 = vpop.f32.mrb[0].mxu0
        %v1125 = vadd.f32 %v1005, %v1124
        %v1126 = vpop.f32.mrb[0].mxu0
        %v1127 = vadd.f32 %v1009, %v1126
        %1128 = vmatprep.mubr.bf16.mxu0 0
        %1129 = vmatmul.mubr.bf16.gmra.mrb[0].mxu0 %v1045
        %v1130 = vpop.f32.mrb[0].mxu0
        %v1131 = vadd.f32 %v1005, %v1130
        %v1132 = vpop.f32.mrb[0].mxu0
        %v1133 = vadd.f32 %v1009, %v1132
        %v1134 = vpop.f32.mrb[0].mxu0
        %v1135 = vadd.f32 %v1005, %v1134
        %v1136 = vpop.f32.mrb[0].mxu0
        %v1137 = vadd.f32 %v1009, %v1136
        %1138 = vmatprep.mubr.bf16.mxu0 0
        %1139 = vmatmul.mubr.bf16.gmra.mrb[0].mxu0 %v1048
        %v1140 = vpop.f32.mrb[0].mxu0
        %v1141 = vadd.f32 %v1005, %v1140
        %v1142 = vpop.f32.mrb[0].mxu0
        %v1143 = vadd.f32 %v1009, %v1142
        %v1144 = vpop.f32.mrb[0].mxu0
        %v1145 = vadd.f32 %v1005, %v1144
        %v1146 = vpop.f32.mrb[0].mxu0
        %v1147 = vadd.f32 %v1009, %v1146
        %1148 = vmatprep.mubr.bf16.mxu0 0
        %1149 = vmatmul.mubr.bf16.gmra.mrb[0].mxu0 %v1051
        %v1150 = vpop.f32.mrb[0].mxu0
        %v1151 = vadd.f32 %v1005, %v1150
        %v1152 = vpop.f32.mrb[0].mxu0
        %v1153 = vadd.f32 %v1009, %v1152
        %v1154 = vpop.f32.mrb[0].mxu0
        %v1155 = vadd.f32 %v1005, %v1154
        %v1156 = vpop.f32.mrb[0].mxu0
        %v1157 = vadd.f32 %v1009, %v1156
        %1158 = vmatprep.mubr.bf16.mxu0 0
        %1159 = vmatmul.mubr.bf16.gmra.mrb[0].mxu0 %v1054
        %v1160 = vpop.f32.mrb[0].mxu0
        %v1161 = vadd.f32 %v1005, %v1160
        %v1162 = vpop.f32.mrb[0].mxu0
        %v1163 = vadd.f32 %v1009, %v1162
        %v1164 = vpop.f32.mrb[0].mxu0
        %v1165 = vadd.f32 %v1005, %v1164
        %v1166 = vpop.f32.mrb[0].mxu0
        %v1167 = vadd.f32 %v1009, %v1166
        %1168 = vdwg.mxu0
        %v1169 = vmax.f32 %v1091, 0.0
        %v1170 = vmax.f32 %v1093, 0.0
        %v1171 = vmax.f32 %v1095, 0.0
        %v1172 = vmax.f32 %v1097, 0.0
        %v1173 = vmax.f32 %v1101, 0.0
        %v1174 = vmax.f32 %v1103, 0.0
        %v1175 = vmax.f32 %v1105, 0.0
        %v1176 = vmax.f32 %v1107, 0.0
        %v1177 = vmax.f32 %v1111, 0.0
        %v1178 = vmax.f32 %v1113, 0.0
        %v1179 = vmax.f32 %v1115, 0.0
        %v1180 = vmax.f32 %v1117, 0.0
        %v1181 = vmax.f32 %v1121, 0.0
        %v1182 = vmax.f32 %v1123, 0.0
        %v1183 = vmax.f32 %v1125, 0.0
        %v1184 = vmax.f32 %v1127, 0.0
        %v1185 = vmax.f32 %v1131, 0.0
        %v1186 = vmax.f32 %v1133, 0.0
        %v1187 = vmax.f32 %v1135, 0.0
        %v1188 = vmax.f32 %v1137, 0.0
        %v1189 = vmax.f32 %v1141, 0.0
        %v1190 = vmax.f32 %v1143, 0.0
        %v1191 = vmax.f32 %v1145, 0.0
        %v1192 = vmax.f32 %v1147, 0.0
        %v1193 = vmax.f32 %v1151, 0.0
        %v1194 = vmax.f32 %v1153, 0.0
        %v1195 = vmax.f32 %v1155, 0.0
        %v1196 = vmax.f32 %v1157, 0.0
        %v1197 = vmax.f32 %v1161, 0.0
        %v1198 = vmax.f32 %v1163, 0.0
        %v1199 = vmax.f32 %v1165, 0.0
        %v1200 = vmax.f32 %v1167, 0.0
        %1201 = vst [vmem:[%s351] sm:$0xff] %v1169
        %1202 = vst [vmem:[%s351 + $0x8] sm:$0xff] %v1170
        %1203 = vst [vmem:[%s351 + $0x10] sm:$0xff] %v1171
        %1204 = vst [vmem:[%s351 + $0x18] sm:$0xff] %v1172
        %1205 = vst [vmem:[%s351 + $0x20] sm:$0xff] %v1173
        %1206 = vst [vmem:[%s351 + $0x28] sm:$0xff] %v1174
        %1207 = vst [vmem:[%s351 + $0x30] sm:$0xff] %v1175
        %1208 = vst [vmem:[%s351 + $0x38] sm:$0xff] %v1176
        %1209 = vst [vmem:[%s351 + $0x40] sm:$0xff] %v1177
        %1210 = vst [vmem:[%s351 + $0x48] sm:$0xff] %v1178
        %1211 = vst [vmem:[%s351 + $0x50] sm:$0xff] %v1179
        %1212 = vst [vmem:[%s351 + $0x58] sm:$0xff] %v1180
        %1213 = vst [vmem:[%s351 + $0x60] sm:$0xff] %v1181
        %1214 = vst [vmem:[%s351 + $0x68] sm:$0xff] %v1182
        %1215 = vst [vmem:[%s351 + $0x70] sm:$0xff] %v1183
        %1216 = vst [vmem:[%s351 + $0x78] sm:$0xff] %v1184
        %1217 = vst [vmem:[%s351 + $0x80] sm:$0xff] %v1185
        %1218 = vst [vmem:[%s351 + $0x88] sm:$0xff] %v1186
        %1219 = vst [vmem:[%s351 + $0x90] sm:$0xff] %v1187
        %1220 = vst [vmem:[%s351 + $0x98] sm:$0xff] %v1188
        %1221 = vst [vmem:[%s351 + $0xa0] sm:$0xff] %v1189
        %1222 = vst [vmem:[%s351 + $0xa8] sm:$0xff] %v1190
        %1223 = vst [vmem:[%s351 + $0xb0] sm:$0xff] %v1191
        %1224 = vst [vmem:[%s351 + $0xb8] sm:$0xff] %v1192
        %1225 = vst [vmem:[%s351 + $0xc0] sm:$0xff] %v1193
        %1226 = vst [vmem:[%s351 + $0xc8] sm:$0xff] %v1194
        %1227 = vst [vmem:[%s351 + $0xd0] sm:$0xff] %v1195
        %1228 = vst [vmem:[%s351 + $0xd8] sm:$0xff] %v1196
        %1229 = vst [vmem:[%s351 + $0xe0] sm:$0xff] %v1197
        %1230 = vst [vmem:[%s351 + $0xe8] sm:$0xff] %v1198
        %1231 = vst [vmem:[%s351 + $0xf0] sm:$0xff] %v1199
        %1232 = vst [vmem:[%s351 + $0xf8] sm:$0xff] %v1200
        %s1233 = sand.u32 %s228, 1
        %s1234 = scalar_lea.sflag [#allocation4], %s1233
        %s1235 = sand.u32 %s228, 1
        %s1236 = smul.addr %s1235, 256
        %s1237 = scalar_lea.vmem [#allocation5], %s1236
        // Predicated region
        $region61: #{tpu_custom_call.1} parent=55 // pred_check
          %p1238 = pneg %p238
        $region62: #{tpu_custom_call.1} parent=55 // pred_check_branch
          %1240 = sbr.rel (%p1238) target = $region64
        $region63: #{tpu_custom_call.1} parent=55 // pred_region
          %s1241 = smul.u32 16, %s26
          %s1243 = ssub.s32 4096, 4096
          %1244 = vsyncadd %s1234, %s1243
          %s1245 = smul.addr %s1241, 2
          %s1246 = smul.addr %s1245, 128
          %s1247 = scalar_lea.hbm %s9, %s1246
          %s1248 = sshll.u32 %s1237, 4
          %s1249 = int_to_ptr.vmem [resolvable:$true] %s1248
          %1254 = dma.vmem_to_hbm [thread:$0]  %s1249, 4096, %s1247, %s1234, 256, 256, 16
        $region64: #{tpu_custom_call.1} parent=55 // pred_fallthru
          _
      $region56: #{tpu_custom_call.1} parent=5 // pred_fallthru
        _
      %p1255 = scmp.le.s32.totalorder 2, %s21
      // Predicated region
      $region65: #{tpu_custom_call.1} parent=5 // pred_check
        %p1256 = pneg %p1255
      $region66: #{tpu_custom_call.1} parent=5 // pred_check_branch
        %1258 = sbr.rel (%p1256) target = $region68
      $region67: #{tpu_custom_call.1} parent=5 // pred_region
        %s1259 = ssub.s32 %s21, 2
        // Predicated region
        $region69: #{tpu_custom_call.1} parent=67 // pred_check
          %p1260 = pneg %p244
        $region70: #{tpu_custom_call.1} parent=67 // pred_check_branch
          %1262 = sbr.rel (%p1260) target = $region72
        $region71: #{tpu_custom_call.1} parent=67 // pred_region
          %s1263 = sand.u32 %s229, 1
          %s1264 = scalar_lea.sflag [#allocation4], %s1263
          %s1265 = sand.u32 %s229, 1
          %s1266 = smul.addr %s1265, 256
          %s1267 = scalar_lea.vmem [#allocation5], %s1266
          %1268 = dma.done %s1264, 4096
        $region72: #{tpu_custom_call.1} parent=67 // pred_fallthru
          _
      $region68: #{tpu_custom_call.1} parent=5 // pred_fallthru
        _
    $region6: #{tpu_custom_call.1} parent=1 // loop_footer
      %s25 = sadd.s32 1, %s21
    $region7: #{tpu_custom_call.1} parent=1 // loop_footer_branch
      %20 = sbr.rel target = $region3
    $region8: #{tpu_custom_call.1} parent=1 // loop_exit
      _
    %1269 = vsyncpa [#allocation3], 1
    %s1270 = scalar_lea.sflag [#allocation3], 1
    %1271 = vsyncpa %s1270, 1
    %1272 = vsyncpa [#allocation4], 1
    %s1273 = scalar_lea.sflag [#allocation4], 1
    %1274 = vsyncpa %s1273, 1

</llo_original>
